<compile_context>
chip_gen: v6e
topology: v6e:2x2x1
jax: 0.10.0
libtpu: 0.0.40
codegen_flags: <defaults>
</compile_context>

<pallas_src>
import functools
import math

import jax
import jax.numpy as jnp
from jax import lax
from jax.experimental import pallas as pl
from jax.experimental.pallas import tpu as pltpu

_LN_EPS = 1e-5
_GELU_C = math.sqrt(2.0 / math.pi)
_MIB = 1024 * 1024


def _gelu_tanh(x):
    # Matches the module's GELU: 0.5*x*(1+tanh(sqrt(2/pi)*(x+0.044715*x^3)))
    return 0.5 * x * (1.0 + jnp.tanh(_GELU_C * (x + 0.044715 * x * x * x)))


def _pick_tm(m):
    # >= 2 tiles whenever cleanly possible (feeds both v7x TCs), tiles multiple of 8,
    # capped at 512 rows so big shapes still fit VMEM with double buffering.
    if m > 1024:
        return 512
    if m >= 16 and m % 16 == 0:
        return m // 2
    return m


def _pick_tf(f):
    # Tile the output-feature axis of the LN+matmul kernels at big F (ViT-L MLP).
    if f <= 2048:
        return f
    return 1024 if f % 1024 == 0 else f


def _pick_tk(k):
    # Tile the contraction axis of the proj/fc2 matmuls at big K (fc2: K = 4C).
    if k <= 1024:
        return k
    return 512 if k % 512 == 0 else k


def _vmem_limit(block_bytes, scratch_bytes=0):
    # Double-buffered streamed blocks + scratch, 2x headroom, clamped to a range that
    # is safe on v5e/v6e (128 MiB physical) and v7x (64 MiB physical).
    need = 2 * block_bytes + scratch_bytes
    return int(min(max(2 * need, 32 * _MIB), 64 * _MIB))


# ---------------------------------------------------------------------------
# Kernel bodies
# ---------------------------------------------------------------------------
def _ln_matmul_kernel(x_ref, g_ref, b_ref, w_ref, wb_ref, o_ref, *, apply_gelu):
    """o = act(LayerNorm(x) @ W + b); LN/GELU in f32, MXU operands in storage dtype."""
    x = x_ref[...].astype(jnp.float32)
    mu = jnp.mean(x, axis=-1, keepdims=True)
    xc = x - mu
    var = jnp.mean(xc * xc, axis=-1, keepdims=True)
    xn = xc * lax.rsqrt(var + _LN_EPS)
    xn = xn * g_ref[...].astype(jnp.float32) + b_ref[...].astype(jnp.float32)
    y = jnp.dot(xn.astype(w_ref.dtype), w_ref[...],
                preferred_element_type=jnp.float32)
    y = y + wb_ref[...].astype(jnp.float32)
    if apply_gelu:
        y = _gelu_tanh(y)
    o_ref[...] = y.astype(o_ref.dtype)


def _matmul_bias_res_kernel(a_ref, w_ref, b_ref, r_ref, o_ref, acc_ref):
    """o = a @ W + b + residual; contraction tiled over the grid's k axis."""
    k = pl.program_id(1)

    @pl.when(k == 0)
    def _():
        acc_ref[...] = jnp.zeros_like(acc_ref)

    acc_ref[...] += jnp.dot(a_ref[...], w_ref[...],
                            preferred_element_type=jnp.float32)

    @pl.when(k == pl.num_programs(1) - 1)
    def _():
        o_ref[...] = (acc_ref[...] + b_ref[...].astype(jnp.float32)
                      + r_ref[...].astype(jnp.float32)).astype(o_ref.dtype)


def _attn_kernel(qkv_ref, o_ref, *, num_heads, scale):
    """Per-batch attention over all heads of one (N, 3C) QKV slab (no transposes)."""
    x = qkv_ref[0]                         # (N, 3C) in storage dtype
    n, c3 = x.shape
    c = c3 // 3
    hd = c // num_heads
    outs = []
    for h in range(num_heads):             # static, unrolled
        # q/k/v column layout matches torch's reshape(B,N,3,nh,hd): slot*C + h*hd + d
        q = (x[:, h * hd:(h + 1) * hd].astype(jnp.float32) * scale).astype(x.dtype)
        k = x[:, c + h * hd:c + (h + 1) * hd]
        v = x[:, 2 * c + h * hd:2 * c + (h + 1) * hd]
        s = lax.dot_general(q, k, (((1,), (1,)), ((), ())),
                            preferred_element_type=jnp.float32)      # (N, N)
        m = jnp.max(s, axis=-1, keepdims=True)
        p = jnp.exp(s - m)
        inv = pl.reciprocal(jnp.sum(p, axis=-1, keepdims=True), approx=True)
        o = jnp.dot(p.astype(x.dtype), v,
                    preferred_element_type=jnp.float32) * inv        # (N, hd)
        outs.append(o)
    o_all = outs[0] if num_heads == 1 else jnp.concatenate(outs, axis=-1)
    o_ref[0] = o_all.astype(o_ref.dtype)


# ---------------------------------------------------------------------------
# pallas_call wrappers
# ---------------------------------------------------------------------------
def _ln_matmul(x2, gamma, beta, w, wb, apply_gelu):
    M, C = x2.shape
    _, F = w.shape
    tm, tf = _pick_tm(M), _pick_tf(F)
    itemsize = jnp.dtype(x2.dtype).itemsize
    kernel = functools.partial(_ln_matmul_kernel, apply_gelu=apply_gelu)
    cost = pl.CostEstimate(
        flops=2 * M * C * F,
        transcendentals=M + (M * F if apply_gelu else 0),
        bytes_accessed=itemsize * (M * C + C * F + M * F + 2 * C + F))
    block_bytes = itemsize * (tm * C + 2 * C + C * tf + tf + tm * tf)
    return pl.pallas_call(
        kernel,
        out_shape=jax.ShapeDtypeStruct((M, F), x2.dtype),
        grid_spec=pltpu.PrefetchScalarGridSpec(
            num_scalar_prefetch=0,
            grid=(pl.cdiv(M, tm), pl.cdiv(F, tf)),
            in_specs=[
                pl.BlockSpec((tm, C), lambda i, j: (i, 0)),   # token tile (invariant in j)
                pl.BlockSpec((1, C), lambda i, j: (0, 0)),    # LN gamma
                pl.BlockSpec((1, C), lambda i, j: (0, 0)),    # LN beta
                pl.BlockSpec((C, tf), lambda i, j: (0, j)),   # weight F-tile
                pl.BlockSpec((1, tf), lambda i, j: (0, j)),   # bias F-tile
            ],
            out_specs=pl.BlockSpec((tm, tf), lambda i, j: (i, j)),
        ),
        compiler_params=pltpu.CompilerParams(
            dimension_semantics=("parallel", "parallel"),
            vmem_limit_bytes=_vmem_limit(block_bytes)),
        cost_estimate=cost,
    )(x2, gamma.reshape(1, C), beta.reshape(1, C), w, wb.reshape(1, F))


def _matmul_bias_res(a, w, b, res):
    M, K = a.shape
    _, F = w.shape
    tm, tk = _pick_tm(M), _pick_tk(K)
    itemsize = jnp.dtype(a.dtype).itemsize
    cost = pl.CostEstimate(
        flops=2 * M * K * F,
        transcendentals=0,
        bytes_accessed=itemsize * (M * K + K * F + 2 * M * F + F))
    block_bytes = itemsize * (tm * tk + tk * F + F + 2 * tm * F)
    return pl.pallas_call(
        _matmul_bias_res_kernel,
        out_shape=jax.ShapeDtypeStruct((M, F), a.dtype),
        grid_spec=pltpu.PrefetchScalarGridSpec(
            num_scalar_prefetch=0,
            grid=(pl.cdiv(M, tm), pl.cdiv(K, tk)),
            in_specs=[
                pl.BlockSpec((tm, tk), lambda i, k: (i, k)),  # activations K-tile
                pl.BlockSpec((tk, F), lambda i, k: (k, 0)),   # weight K-tile
                pl.BlockSpec((1, F), lambda i, k: (0, 0)),    # bias
                pl.BlockSpec((tm, F), lambda i, k: (i, 0)),   # residual tile
            ],
            out_specs=pl.BlockSpec((tm, F), lambda i, k: (i, 0)),
            scratch_shapes=[pltpu.VMEM((tm, F), jnp.float32)],
        ),
        compiler_params=pltpu.CompilerParams(
            dimension_semantics=("parallel", "arbitrary"),
            vmem_limit_bytes=_vmem_limit(block_bytes, scratch_bytes=4 * tm * F)),
        cost_estimate=cost,
    )(a, w, b.reshape(1, F), res)


def _attention(qkv3, num_heads, scale):
    B, N, C3 = qkv3.shape
    C = C3 // 3
    hd = C // num_heads
    itemsize = jnp.dtype(qkv3.dtype).itemsize
    kernel = functools.partial(_attn_kernel, num_heads=num_heads, scale=scale)
    cost = pl.CostEstimate(
        flops=4 * B * num_heads * N * N * hd,
        transcendentals=B * num_heads * (N * N + N),
        bytes_accessed=itemsize * (B * N * C3 + B * N * C))
    block_bytes = itemsize * (N * C3 + N * C)
    return pl.pallas_call(
        kernel,
        out_shape=jax.ShapeDtypeStruct((B, N, C), qkv3.dtype),
        grid_spec=pltpu.PrefetchScalarGridSpec(
            num_scalar_prefetch=0,
            grid=(B,),
            in_specs=[pl.BlockSpec((1, N, C3), lambda b: (b, 0, 0))],
            out_specs=pl.BlockSpec((1, N, C), lambda b: (b, 0, 0)),
        ),
        compiler_params=pltpu.CompilerParams(
            dimension_semantics=("parallel",),
            vmem_limit_bytes=_vmem_limit(block_bytes)),
        cost_estimate=cost,
    )(qkv3)


# ---------------------------------------------------------------------------
# ViTBlock forward
# ---------------------------------------------------------------------------
def vit_block(x, p, num_heads):
    """x: (B, N, C). Returns (B, N, C). Inference path (dropout/drop_path = identity)."""
    # TODO(synk): training-mode Dropout/DropPath masks are not implemented (p=0.0 identity).
    B, N, C = x.shape
    assert C % num_heads == 0
    hd = C // num_heads
    scale = float(hd) ** -0.5
    M = B * N
    x2 = x.reshape(M, C)

    # norm1 + qkv projection (qkv_bias=False -> zero bias); output stays (M, 3C)
    qkv = _ln_matmul(x2, p["ln1_g"], p["ln1_b"], p["w_qkv"], p["b_qkv"],
                     apply_gelu=False)                                   # (M, 3C)

    # Attention: heads are sliced inside the kernel -> no XLA head-split transposes.
    o = _attention(qkv.reshape(B, N, 3 * C), num_heads, scale)          # (B, N, C)

    # attention output projection + first residual
    x_attn = _matmul_bias_res(o.reshape(M, C), p["w_proj"], p["b_proj"], x2)  # (M, C)

    # norm2 + fc1 + GELU(tanh)
    h = _ln_matmul(x_attn, p["ln2_g"], p["ln2_b"], p["w_fc1"], p["b_fc1"],
                   apply_gelu=True)                                      # (M, H)

    # fc2 + second residual
    out = _matmul_bias_res(h, p["w_fc2"], p["b_fc2"], x_attn)            # (M, C)
    return out.reshape(B, N, C)


# ---------------------------------------------------------------------------
# Pure-JAX reference (mirrors the PyTorch forward at inference)
# ---------------------------------------------------------------------------
def _vit_block_ref(x, p, num_heads):
    B, N, C = x.shape
    hd = C // num_heads
    scale = float(hd) ** -0.5

    def ln(z, g, b):
        mu = jnp.mean(z, -1, keepdims=True)
        var = jnp.mean((z - mu) ** 2, -1, keepdims=True)
        return (z - mu) / jnp.sqrt(var + _LN_EPS) * g + b

    xn = ln(x, p["ln1_g"], p["ln1_b"])
    qkv = xn @ p["w_qkv"] + p["b_qkv"]
    qkv = qkv.reshape(B, N, 3, num_heads, hd).transpose(2, 0, 3, 1, 4)
    q, k, v = qkv[0], qkv[1], qkv[2]                        # (B, nh, N, hd)
    attn = (q @ jnp.swapaxes(k, -2, -1)) * scale
    attn = jax.nn.softmax(attn, axis=-1)
    o = (attn @ v).transpose(0, 2, 1, 3).reshape(B, N, C)
    x = x + o @ p["w_proj"] + p["b_proj"]
    xn2 = ln(x, p["ln2_g"], p["ln2_b"])
    h = _gelu_tanh(xn2 @ p["w_fc1"] + p["b_fc1"])
    return x + h @ p["w_fc2"] + p["b_fc2"]


if __name__ == "__main__":
    key = jax.random.PRNGKey(0)
    ks = jax.random.split(key, 12)

    B, N, C = 2, 8, 32
    num_heads = 4
    hidden = int(C * 4.0)

    x = jax.random.normal(ks[0], (B, N, C), dtype=jnp.float32)
    params = dict(
        ln1_g=1.0 + 0.1 * jax.random.normal(ks[1], (C,), jnp.float32),
        ln1_b=0.1 * jax.random.normal(ks[2], (C,), jnp.float32),
        w_qkv=0.1 * jax.random.normal(ks[3], (C, 3 * C), jnp.float32),
        b_qkv=jnp.zeros((3 * C,), jnp.float32),              # qkv_bias=False
        w_proj=0.1 * jax.random.normal(ks[4], (C, C), jnp.float32),
        b_proj=0.1 * jax.random.normal(ks[5], (C,), jnp.float32),
        ln2_g=1.0 + 0.1 * jax.random.normal(ks[6], (C,), jnp.float32),
        ln2_b=0.1 * jax.random.normal(ks[7], (C,), jnp.float32),
        w_fc1=0.1 * jax.random.normal(ks[8], (C, hidden), jnp.float32),
        b_fc1=0.05 * jax.random.normal(ks[9], (hidden,), jnp.float32),
        w_fc2=0.1 * jax.random.normal(ks[10], (hidden, C), jnp.float32),
        b_fc2=0.05 * jax.random.normal(ks[11], (C,), jnp.float32),
    )

    ref = _vit_block_ref(x, params, num_heads)

    # f32 storage path (tight check)
    out = jax.block_until_ready(vit_block(x, params, num_heads))
    assert out.shape == (B, N, C)
    err = float(jnp.max(jnp.abs(out - ref)))
    assert jnp.allclose(out, ref, atol=2e-3, rtol=2e-3), f"f32 max abs err {err}"

    # bf16 storage / bf16 MXU operands, f32 accumulation (loose check)
    x_bf = x.astype(jnp.bfloat16)
    params_bf = {name: v.astype(jnp.bfloat16) for name, v in params.items()}
    out_bf = jax.block_until_ready(vit_block(x_bf, params_bf, num_heads))
    assert out_bf.dtype == jnp.bfloat16
    err_bf = float(jnp.max(jnp.abs(out_bf.astype(jnp.float32) - ref)))
    assert math.isfinite(err_bf) and err_bf < 0.25, f"bf16 max abs err {err_bf}"

    print("KERNEL_OK")
</pallas_src>

<mosaic_0001>
module attributes {stable_mosaic.version = 11 : i64} {
  func.func @_ln_matmul_kernel(%arg0: i32, %arg1: i32, %arg2: memref<8x32xf32, #tpu.memory_space<vmem>>, %arg3: memref<1x32xf32, #tpu.memory_space<vmem>>, %arg4: memref<1x32xf32, #tpu.memory_space<vmem>>, %arg5: memref<32x96xf32, #tpu.memory_space<vmem>>, %arg6: memref<1x96xf32, #tpu.memory_space<vmem>>, %arg7: memref<8x96xf32, #tpu.memory_space<vmem>>) attributes {dimension_semantics = [#tpu.dimension_semantics<parallel>, #tpu.dimension_semantics<parallel>], iteration_bounds = array<i64: 2, 1>, scalar_prefetch = 0 : i64, scratch_operands = 0 : i64, tpu.core_type = #tpu.core_type<tc>, window_params = [{transform_indices = @transform_0, window_bounds = array<i64: 8, 32>}, {pipeline_mode = #tpu.pipeline_mode<synchronous>, transform_indices = @transform_1, window_bounds = array<i64: 1, 32>}, {pipeline_mode = #tpu.pipeline_mode<synchronous>, transform_indices = @transform_2, window_bounds = array<i64: 1, 32>}, {transform_indices = @transform_3, window_bounds = array<i64: 32, 96>}, {transform_indices = @transform_4, window_bounds = array<i64: 1, 96>}, {transform_indices = @transform_5, window_bounds = array<i64: 8, 96>}]} {
    %c0 = arith.constant 0 : index
    %c0_0 = arith.constant 0 : index
    %0 = vector.load %arg2[%c0, %c0_0] : memref<8x32xf32, #tpu.memory_space<vmem>>, vector<8x32xf32>
    %cst = arith.constant dense<0.000000e+00> : vector<8xf32>
    %1 = vector.multi_reduction <add>, %0, %cst [1] : vector<8x32xf32> to vector<8xf32>
    %2 = vector.shape_cast %1 : vector<8xf32> to vector<8x1xf32>
    %cst_1 = arith.constant 3.200000e+01 : f32
    %3 = vector.broadcast %cst_1 : f32 to vector<8x1xf32>
    %4 = arith.divf %2, %3 : vector<8x1xf32>
    %5 = vector.broadcast %4 : vector<8x1xf32> to vector<8x32xf32>
    %6 = arith.subf %0, %5 : vector<8x32xf32>
    %7 = arith.mulf %6, %6 : vector<8x32xf32>
    %cst_2 = arith.constant dense<0.000000e+00> : vector<8xf32>
    %8 = vector.multi_reduction <add>, %7, %cst_2 [1] : vector<8x32xf32> to vector<8xf32>
    %9 = vector.shape_cast %8 : vector<8xf32> to vector<8x1xf32>
    %cst_3 = arith.constant 3.200000e+01 : f32
    %10 = vector.broadcast %cst_3 : f32 to vector<8x1xf32>
    %11 = arith.divf %9, %10 : vector<8x1xf32>
    %cst_4 = arith.constant 9.99999974E-6 : f32
    %12 = vector.broadcast %cst_4 : f32 to vector<8x1xf32>
    %13 = arith.addf %11, %12 : vector<8x1xf32>
    %14 = math.rsqrt %13 : vector<8x1xf32>
    %15 = vector.broadcast %14 : vector<8x1xf32> to vector<8x32xf32>
    %16 = arith.mulf %6, %15 : vector<8x32xf32>
    %c0_5 = arith.constant 0 : index
    %c0_6 = arith.constant 0 : index
    %17 = vector.load %arg3[%c0_5, %c0_6] : memref<1x32xf32, #tpu.memory_space<vmem>>, vector<1x32xf32>
    %18 = vector.broadcast %17 : vector<1x32xf32> to vector<8x32xf32>
    %19 = arith.mulf %16, %18 : vector<8x32xf32>
    %c0_7 = arith.constant 0 : index
    %c0_8 = arith.constant 0 : index
    %20 = vector.load %arg4[%c0_7, %c0_8] : memref<1x32xf32, #tpu.memory_space<vmem>>, vector<1x32xf32>
    %21 = vector.broadcast %20 : vector<1x32xf32> to vector<8x32xf32>
    %22 = arith.addf %19, %21 : vector<8x32xf32>
    %c0_9 = arith.constant 0 : index
    %c0_10 = arith.constant 0 : index
    %23 = vector.load %arg5[%c0_9, %c0_10] : memref<32x96xf32, #tpu.memory_space<vmem>>, vector<32x96xf32>
    %cst_11 = arith.constant dense<0.000000e+00> : vector<8x96xf32>
    %24 = tpu.matmul %22, %23, %cst_11 {dimension_numbers = #tpu.dot_dimension_numbers<[1], [0], [0], [1], [0, 0, 1, 1], [], []>} : vector<8x32xf32>, vector<32x96xf32>, vector<8x96xf32> -> vector<8x96xf32>
    %c0_12 = arith.constant 0 : index
    %c0_13 = arith.constant 0 : index
    %25 = vector.load %arg6[%c0_12, %c0_13] : memref<1x96xf32, #tpu.memory_space<vmem>>, vector<1x96xf32>
    %26 = vector.broadcast %25 : vector<1x96xf32> to vector<8x96xf32>
    %27 = arith.addf %24, %26 : vector<8x96xf32>
    %c0_14 = arith.constant 0 : index
    %c0_15 = arith.constant 0 : index
    %28 = vector.load %arg7[%c0_14, %c0_15] : memref<8x96xf32, #tpu.memory_space<vmem>>, vector<8x96xf32>
    tpu.vector_store %arg7[%c0_14, %c0_15], %27 {strides = array<i32>} : memref<8x96xf32, #tpu.memory_space<vmem>>, vector<8x96xf32>,
    return
  }
  func.func @transform_0(%arg0: i32, %arg1: i32) -> (i32, i32) {
    %c0_i32 = arith.constant 0 : i32
    %c0_i32_0 = arith.constant 0 : i32
    return %arg0, %c0_i32 : i32, i32
  }
  func.func @transform_1(%arg0: i32, %arg1: i32) -> (i32, i32) {
    %c0_i32 = arith.constant 0 : i32
    %c0_i32_0 = arith.constant 0 : i32
    %c0_i32_1 = arith.constant 0 : i32
    return %c0_i32, %c0_i32_0 : i32, i32
  }
  func.func @transform_2(%arg0: i32, %arg1: i32) -> (i32, i32) {
    %c0_i32 = arith.constant 0 : i32
    %c0_i32_0 = arith.constant 0 : i32
    %c0_i32_1 = arith.constant 0 : i32
    return %c0_i32, %c0_i32_0 : i32, i32
  }
  func.func @transform_3(%arg0: i32, %arg1: i32) -> (i32, i32) {
    %c0_i32 = arith.constant 0 : i32
    %c0_i32_0 = arith.constant 0 : i32
    return %c0_i32, %arg1 : i32, i32
  }
  func.func @transform_4(%arg0: i32, %arg1: i32) -> (i32, i32) {
    %c0_i32 = arith.constant 0 : i32
    %c0_i32_0 = arith.constant 0 : i32
    return %c0_i32, %arg1 : i32, i32
  }
  func.func @transform_5(%arg0: i32, %arg1: i32) -> (i32, i32) {
    %c0_i32 = arith.constant 0 : i32
    return %arg0, %arg1 : i32, i32
  }
}

</mosaic_0001>

<llo_original>
// kernel: tpu_custom_call.1
$region0: #{tpu_custom_call.1}
  #allocation0 [shape = 'u32[]', space=smem, size = 0x4, offset = 0x4, fixed_abs, tag = 'smem constant byte address 0x4 - core index']
  #allocation1 [shape = 'u32[144,128]{1,0:T(1,128)}', space=vmem, size = 0x12000, scoped, tag = 'internal scratch']
  %s0 = inlined_call_operand.hbm [shape: f32[16,32], index: 0, kind: input, shape index: {}]
  %s1 = inlined_call_operand.vmem [shape: f32[1,32], index: 1, kind: input, shape index: {}]
  %s2 = inlined_call_operand.vmem [shape: f32[1,32], index: 2, kind: input, shape index: {}]
  %s3 = inlined_call_operand.hbm [shape: f32[32,96], index: 3, kind: input, shape index: {}]
  %s4 = inlined_call_operand.vmem [shape: f32[1,96], index: 4, kind: input, shape index: {}]
  %s5 = inlined_call_operand.hbm [shape: f32[16,96], index: 5, kind: output, shape index: {}]
  %s6 = sld [smem:[#allocation0]]
  $region61: #{tpu_custom_call.1} parent=0
    _
  %s8 = ssub.s32 1, %s6
  %s9 = scalar_select 0, %s8, %s6
  $region1: #{tpu_custom_call.1} parent=0
    #allocation2 [shape = 'u8[8192]{0}', space=vmem, size = 0x2000, scoped, tag = 'input window, operand 0']
    #allocation3 [shape = 's32[2]{0}', space=sflag, size = 0x8, scoped, tag = 'scoped memory for tpu_custom_call.1']
    #allocation4 [shape = 's32[2]{0}', space=sflag, size = 0x8, scoped, tag = 'scoped memory for tpu_custom_call.1']
    #allocation5 [shape = 'u8[16384]{0}', space=vmem, size = 0x4000, scoped, tag = 'input window, operand 3, single buffered']
    #allocation6 [shape = 's32[1]{0}', space=sflag, size = 0x4, scoped, tag = 'scoped memory for tpu_custom_call.1']
    #allocation7 [shape = 'u8[8192]{0}', space=vmem, size = 0x2000, scoped, tag = 'output window, operand 0']
    %10 = vsyncpa [#allocation3], 0
    %s11 = scalar_lea.sflag [#allocation3], 1
    %12 = vsyncpa %s11, 0
    %13 = vsyncpa [#allocation6], 0
    %14 = vsyncpa [#allocation4], 0
    %s15 = scalar_lea.sflag [#allocation4], 1
    %16 = vsyncpa %s15, 0
    loop: start=0, step=1, limit=4
    $region2: #{tpu_custom_call.1} parent=1 // loop_pre_header
      _
    $region3: #{tpu_custom_call.1} parent=1 // loop_header
      %s18 = sphi 0, %s22
      %p19 = scmp.ge.s32.totalorder %s18, 4
      %s25 = sphi 0, %s37
      %s26 = sphi 0, %s33
      %s27 = sphi 0, %s25
      %s28 = sphi 0, %s26
      %s29 = sphi 0, %s27
      %s30 = sphi 0, %s28
      %s40 = sphi 0, %s42
      %s43 = sphi 0, %s40
      %s44 = sphi 0, %s43
      %s60 = sphi 0, %s44
      %s64 = sphi 0, %s64
      %s66 = sphi 0, %s64
      %s67 = sphi 0, %s66
      %s81 = sphi 0, %s67
      %s85 = sphi 0, %s85
      %s87 = sphi 0, %s85
      %s88 = sphi 0, %s87
      %s102 = sphi 0, %s88
      %s108 = sphi 0, %s110
      %s111 = sphi 0, %s108
      %s112 = sphi 0, %s111
      %s128 = sphi 0, %s112
      %s134 = sphi 0, %s136
      %s137 = sphi 0, %s134
      %s138 = sphi 0, %s137
      %s154 = sphi 0, %s138
      %s162 = sphi 0, %s164
      %s165 = sphi 0, %s162
      %s166 = sphi 0, %s165
      %s182 = sphi 0, %s166
    $region4: #{tpu_custom_call.1} parent=1 // loop_header_branch
      %21 = sbr.rel (%p19) target = $region8
    $region5: #{tpu_custom_call.1} parent=1 // loop_body
      %s23 = ssub.s32 %s18, 1
      %s24 = ssub.s32 %s18, 2
      %s31 = sadd.s32 1, %s26
      %p32 = scmp.ge.s32.totalorder %s31, 1
      %s33 = scalar_select %p32, 0, %s31
      %s34 = sadd.s32 1, %s25
      %s35 = scalar_select %p32, %s34, %s25
      %p36 = scmp.ge.s32.totalorder %s35, 2
      %s37 = scalar_select %p36, 0, %s35
      %s38 = ssub.s32 %s25, %s37
      %p39 = scmp.eq.s32.totalorder %s38, 0
      %s41 = sadd.s32 %s40, 1
      %s42 = scalar_select %p39, %s40, %s41
      %p45 = pneg %p39
      %p46 = scmp.eq.s32.totalorder %s18, 1
      %p47 = por %p45, %p46
      %p48 = scmp.ne.s32.totalorder %s40, %s43
      %p49 = scmp.eq.s32.totalorder %s18, 0
      %p50 = por %p48, %p49
      %p51 = scmp.ne.s32.totalorder %s40, %s43
      %p52 = scmp.eq.s32.totalorder %s23, 1
      %p53 = por %p51, %p52
      %p54 = scmp.ne.s32.totalorder %s43, %s44
      %p55 = scmp.eq.s32.totalorder %s23, 0
      %p56 = por %p54, %p55
      %p57 = scmp.ne.s32.totalorder %s43, %s44
      %p58 = scmp.eq.s32.totalorder %s24, 1
      %p59 = por %p57, %p58
      %p61 = scmp.ne.s32.totalorder %s44, %s60
      %p62 = scmp.eq.s32.totalorder %s24, 0
      %p63 = por %p61, %p62
      %s65 = sadd.s32 %s64, 1
      %p68 = scmp.eq.s32.totalorder %s18, 1
      %p69 = scmp.ne.s32.totalorder %s64, %s66
      %p70 = scmp.eq.s32.totalorder %s18, 0
      %p71 = por %p69, %p70
      %p72 = scmp.ne.s32.totalorder %s64, %s66
      %p73 = scmp.eq.s32.totalorder %s23, 1
      %p74 = por %p72, %p73
      %p75 = scmp.ne.s32.totalorder %s66, %s67
      %p76 = scmp.eq.s32.totalorder %s23, 0
      %p77 = por %p75, %p76
      %p78 = scmp.ne.s32.totalorder %s66, %s67
      %p79 = scmp.eq.s32.totalorder %s24, 1
      %p80 = por %p78, %p79
      %p82 = scmp.ne.s32.totalorder %s67, %s81
      %p83 = scmp.eq.s32.totalorder %s24, 0
      %p84 = por %p82, %p83
      %s86 = sadd.s32 %s85, 1
      %p89 = scmp.eq.s32.totalorder %s18, 1
      %p90 = scmp.ne.s32.totalorder %s85, %s87
      %p91 = scmp.eq.s32.totalorder %s18, 0
      %p92 = por %p90, %p91
      %p93 = scmp.ne.s32.totalorder %s85, %s87
      %p94 = scmp.eq.s32.totalorder %s23, 1
      %p95 = por %p93, %p94
      %p96 = scmp.ne.s32.totalorder %s87, %s88
      %p97 = scmp.eq.s32.totalorder %s23, 0
      %p98 = por %p96, %p97
      %p99 = scmp.ne.s32.totalorder %s87, %s88
      %p100 = scmp.eq.s32.totalorder %s24, 1
      %p101 = por %p99, %p100
      %p103 = scmp.ne.s32.totalorder %s88, %s102
      %p104 = scmp.eq.s32.totalorder %s24, 0
      %p105 = por %p103, %p104
      %s106 = ssub.s32 %s26, %s33
      %p107 = scmp.eq.s32.totalorder %s106, 0
      %s109 = sadd.s32 %s108, 1
      %s110 = scalar_select %p107, %s108, %s109
      %p113 = pneg %p107
      %p114 = scmp.eq.s32.totalorder %s18, 1
      %p115 = por %p113, %p114
      %p116 = scmp.ne.s32.totalorder %s108, %s111
      %p117 = scmp.eq.s32.totalorder %s18, 0
      %p118 = por %p116, %p117
      %p119 = scmp.ne.s32.totalorder %s108, %s111
      %p120 = scmp.eq.s32.totalorder %s23, 1
      %p121 = por %p119, %p120
      %p122 = scmp.ne.s32.totalorder %s111, %s112
      %p123 = scmp.eq.s32.totalorder %s23, 0
      %p124 = por %p122, %p123
      %p125 = scmp.ne.s32.totalorder %s111, %s112
      %p126 = scmp.eq.s32.totalorder %s24, 1
      %p127 = por %p125, %p126
      %p129 = scmp.ne.s32.totalorder %s112, %s128
      %p130 = scmp.eq.s32.totalorder %s24, 0
      %p131 = por %p129, %p130
      %s132 = ssub.s32 %s26, %s33
      %p133 = scmp.eq.s32.totalorder %s132, 0
      %s135 = sadd.s32 %s134, 1
      %s136 = scalar_select %p133, %s134, %s135
      %p139 = pneg %p133
      %p140 = scmp.eq.s32.totalorder %s18, 1
      %p141 = por %p139, %p140
      %p142 = scmp.ne.s32.totalorder %s134, %s137
      %p143 = scmp.eq.s32.totalorder %s18, 0
      %p144 = por %p142, %p143
      %p145 = scmp.ne.s32.totalorder %s134, %s137
      %p146 = scmp.eq.s32.totalorder %s23, 1
      %p147 = por %p145, %p146
      %p148 = scmp.ne.s32.totalorder %s137, %s138
      %p149 = scmp.eq.s32.totalorder %s23, 0
      %p150 = por %p148, %p149
      %p151 = scmp.ne.s32.totalorder %s137, %s138
      %p152 = scmp.eq.s32.totalorder %s24, 1
      %p153 = por %p151, %p152
      %p155 = scmp.ne.s32.totalorder %s138, %s154
      %p156 = scmp.eq.s32.totalorder %s24, 0
      %p157 = por %p155, %p156
      %s158 = ssub.s32 %s25, %s37
      %s159 = ssub.s32 %s26, %s33
      %s160 = sor.u32 %s158, %s159
      %p161 = scmp.eq.s32.totalorder %s160, 0
      %s163 = sadd.s32 %s162, 1
      %s164 = scalar_select %p161, %s162, %s163
      %p167 = pneg %p161
      %p168 = scmp.eq.s32.totalorder %s18, 1
      %p169 = por %p167, %p168
      %p170 = scmp.ne.s32.totalorder %s162, %s165
      %p171 = scmp.eq.s32.totalorder %s18, 0
      %p172 = por %p170, %p171
      %p173 = scmp.ne.s32.totalorder %s162, %s165
      %p174 = scmp.eq.s32.totalorder %s23, 1
      %p175 = por %p173, %p174
      %p176 = scmp.ne.s32.totalorder %s165, %s166
      %p177 = scmp.eq.s32.totalorder %s23, 0
      %p178 = por %p176, %p177
      %p179 = scmp.ne.s32.totalorder %s165, %s166
      %p180 = scmp.eq.s32.totalorder %s24, 1
      %p181 = por %p179, %p180
      %p183 = scmp.ne.s32.totalorder %s166, %s182
      %p184 = scmp.eq.s32.totalorder %s24, 0
      %p185 = por %p183, %p184
      %p186 = scmp.le.s32.totalorder 1, %s18
      %p187 = scmp.lt.s32.totalorder %s18, 3
      %p188 = pnand %p186, %p187
      %p189 = pneg %p188
      // Predicated region
      $region9: #{tpu_custom_call.1} parent=5 // pred_check
        _
      $region10: #{tpu_custom_call.1} parent=5 // pred_check_branch
        %191 = sbr.rel (%p188) target = $region12
      $region11: #{tpu_custom_call.1} parent=5 // pred_region
        %s192 = ssub.s32 %s18, 1
        // Predicated region
        $region13: #{tpu_custom_call.1} parent=11 // pred_check
          %p193 = pneg %p77
        $region14: #{tpu_custom_call.1} parent=11 // pred_check_branch
          %195 = sbr.rel (%p193) target = $region16
        $region15: #{tpu_custom_call.1} parent=11 // pred_region
          _
        $region16: #{tpu_custom_call.1} parent=11 // pred_fallthru
          _
        // Predicated region
        $region17: #{tpu_custom_call.1} parent=11 // pred_check
          %p196 = pneg %p98
        $region18: #{tpu_custom_call.1} parent=11 // pred_check_branch
          %198 = sbr.rel (%p196) target = $region20
        $region19: #{tpu_custom_call.1} parent=11 // pred_region
          _
        $region20: #{tpu_custom_call.1} parent=11 // pred_fallthru
          _
        // Predicated region
        $region21: #{tpu_custom_call.1} parent=11 // pred_check
          %p199 = pneg %p124
        $region22: #{tpu_custom_call.1} parent=11 // pred_check_branch
          %201 = sbr.rel (%p199) target = $region24
        $region23: #{tpu_custom_call.1} parent=11 // pred_region
          %s203 = ssub.s32 512, 512
          %204 = vsyncadd [#allocation6], %s203
          %s205 = smul.addr %s28, 128
          %s206 = scalar_lea.hbm %s3, %s205
          %s207 = sshll.u32 [#allocation5], 4
          %s208 = int_to_ptr.vmem [resolvable:$true] %s207
          %213 = dma.hbm_to_vmem [thread:$0]  %s206, 512, %s208, [#allocation6], 128, 128, 8
        $region24: #{tpu_custom_call.1} parent=11 // pred_fallthru
          _
        // Predicated region
        $region25: #{tpu_custom_call.1} parent=11 // pred_check
          %p214 = pneg %p150
        $region26: #{tpu_custom_call.1} parent=11 // pred_check_branch
          %216 = sbr.rel (%p214) target = $region28
        $region27: #{tpu_custom_call.1} parent=11 // pred_region
          %p217 = scmp.lt.s32.totalorder %s28, 0
          %s218 = scalar_select %p217, %s28, 0
          %s219 = scalar_lea.vmem %s4, %s218
        $region28: #{tpu_custom_call.1} parent=11 // pred_fallthru
          _
      $region12: #{tpu_custom_call.1} parent=5 // pred_fallthru
        _
      %p220 = scmp.lt.s32.totalorder %s18, 2
      // Predicated region
      $region29: #{tpu_custom_call.1} parent=5 // pred_check
        %p221 = pneg %p220
      $region30: #{tpu_custom_call.1} parent=5 // pred_check_branch
        %223 = sbr.rel (%p221) target = $region32
      $region31: #{tpu_custom_call.1} parent=5 // pred_region
        // Predicated region
        $region33: #{tpu_custom_call.1} parent=31 // pred_check
          %p224 = pneg %p50
        $region34: #{tpu_custom_call.1} parent=31 // pred_check_branch
          %226 = sbr.rel (%p224) target = $region36
        $region35: #{tpu_custom_call.1} parent=31 // pred_region
          %s227 = sand.u32 %s40, 1
          %s228 = scalar_lea.sflag [#allocation3], %s227
          %s229 = sand.u32 %s40, 1
          %s230 = smul.addr %s229, 8
          %s231 = scalar_lea.vmem [#allocation2], %s230
          %s233 = ssub.s32 128, 128
          %234 = vsyncadd %s228, %s233
          %s235 = smul.addr %s25, 128
          %s236 = scalar_lea.hbm %s0, %s235
          %s238 = sshll.u32 %s231, 4
          %s239 = int_to_ptr.vmem [resolvable:$true] %s238
          %241 = dma.hbm_to_vmem [thread:$0]  %s236, 128, %s239, %s228
        $region36: #{tpu_custom_call.1} parent=31 // pred_fallthru
          _
      $region32: #{tpu_custom_call.1} parent=5 // pred_fallthru
        _
      %p242 = scmp.le.s32.totalorder 1, %s18
      %p243 = scmp.lt.s32.totalorder %s18, 3
      %p244 = pnand %p242, %p243
      %p245 = pneg %p244
      // Predicated region
      $region37: #{tpu_custom_call.1} parent=5 // pred_check
        _
      $region38: #{tpu_custom_call.1} parent=5 // pred_check_branch
        %247 = sbr.rel (%p244) target = $region40
      $region39: #{tpu_custom_call.1} parent=5 // pred_region
        %s248 = ssub.s32 %s18, 1
        %s249 = sand.u32 %s43, 1
        %s250 = scalar_lea.sflag [#allocation3], %s249
        %s251 = sand.u32 %s43, 1
        %s252 = smul.addr %s251, 8
        %s253 = scalar_lea.vmem [#allocation2], %s252
        // Predicated region
        $region41: #{tpu_custom_call.1} parent=39 // pred_check
          %p254 = pneg %p56
        $region42: #{tpu_custom_call.1} parent=39 // pred_check_branch
          %256 = sbr.rel (%p254) target = $region44
        $region43: #{tpu_custom_call.1} parent=39 // pred_region
          %257 = dma.done %s250, 128
        $region44: #{tpu_custom_call.1} parent=39 // pred_fallthru
          _
        // Predicated region
        $region45: #{tpu_custom_call.1} parent=39 // pred_check
          %p258 = pneg %p124
        $region46: #{tpu_custom_call.1} parent=39 // pred_check_branch
          %260 = sbr.rel (%p258) target = $region48
        $region47: #{tpu_custom_call.1} parent=39 // pred_region
          %261 = dma.done [#allocation6], 512
        $region48: #{tpu_custom_call.1} parent=39 // pred_fallthru
          _
        %s262 = sand.u32 %s43, 1
        %s263 = scalar_lea.sflag [#allocation3], %s262
        %s264 = sand.u32 %s43, 1
        %s265 = smul.addr %s264, 8
        %s266 = scalar_lea.vmem [#allocation2], %s265
        %p267 = pneg %p56
        %p268 = pneg %p53
        %p269 = pneg %p77
        %p270 = pneg %p74
        %p271 = pneg %p98
        %p272 = pneg %p95
        %p273 = pneg %p124
        %p274 = pneg %p121
        %p275 = scmp.lt.s32.totalorder %s28, 0
        %s276 = scalar_select %p275, %s28, 0
        %s277 = scalar_lea.vmem %s4, %s276
        %p278 = pneg %p150
        %p279 = pneg %p147
        %p280 = pneg %p178
        %p281 = pneg %p175
        %s282 = sand.u32 %s165, 1
        %s283 = scalar_lea.sflag [#allocation4], %s282
        %s284 = sand.u32 %s165, 1
        %s285 = smul.addr %s284, 8
        %s286 = scalar_lea.vmem [#allocation7], %s285
        %p287 = scmp.lt.s32.totalorder %s28, 0
        %s288 = scalar_select %p287, %s28, 0
        %s289 = scalar_lea.vmem %s4, %s288
        %v290 = vld [vmem:[%s253] sm:$0xff]
        %vm291 = vcmask 261120
        %v292 = vsel %vm291, %v290, 0.0
        %293 = vadd.xlane.f32.xlu0 %v292
        %v294 = vpop.xlane.xlu0 %293
        %v295 = vrcp.pop 32.0
        %v296 = vmul.f32 %v294, %v295
        %v297 = vsub.f32 %v290, %v296
        %v298 = vmul.f32 %v297, %v297
        %v299 = vsel %vm291, %v298, 0.0
        %300 = vadd.xlane.f32.xlu0 %v299
        %v301 = vpop.xlane.xlu0 %300
        %v302 = vmul.f32 %v301, %v295
        %v303 = vadd.f32 %v302, 1e-05
        %v304 = vrsqrt.pop %v303
        %v305 = vmul.f32 %v297, %v304
        %v306 = vld [vmem:[%s1] sm:$0x1]
        %v308 = vlaneseq
        %v309 = vshrl.u32 %v308, 7
        %v310 = vsub.s32 0, %v309
        %v311 = vrot.slane %v306, %v310
        %v313 = vmul.f32 %v305, %v311
        %v314 = vld [vmem:[%s2] sm:$0x1]
        %v316 = vlaneseq
        %v317 = vshrl.u32 %v316, 7
        %v318 = vsub.s32 0, %v317
        %v319 = vrot.slane %v314, %v318
        %v321 = vadd.f32 %v313, %v319
        %v322 = vld [vmem:[#allocation5] sm:$0xff]
        %v323 = vld [vmem:[#allocation5 + $0x8] sm:$0xff]
        %v324 = vld [vmem:[#allocation5 + $0x10] sm:$0xff]
        %v325 = vld [vmem:[#allocation5 + $0x18] sm:$0xff]
        %v326 = vld [vmem:[%s289] sm:$0x1]
        %v328 = vlaneseq
        %v329 = vshrl.u32 %v328, 7
        %v330 = vsub.s32 0, %v329
        %v331 = vrot.slane %v326, %v330
        %v334 = vsel %vm291, %v321, 0
        %336 = vmatprep.subr.mxu0 0.0
        %337 = vmatpush1.msra.mxu0 0.0
        %338 = vmatprep.subr.mxu0 0.0
        %339 = vmatpush1.msra.mxu0 0.0
        %340 = vmatprep.subr.mxu0 0.0
        %341 = vmatpush1.msra.mxu0 0.0
        %342 = vmatprep.subr.mxu0 0.0
        %343 = vmatpush1.msra.mxu0 0.0
        %344 = vmatprep.subr.mxu0 0.0
        %345 = vmatpush1.msra.mxu0 0.0
        %346 = vmatprep.subr.mxu0 0.0
        %347 = vmatpush1.msra.mxu0 0.0
        %348 = vmatprep.subr.mxu0 0.0
        %349 = vmatpush1.msra.mxu0 0.0
        %350 = vmatprep.subr.mxu0 0.0
        %351 = vmatpush1.msra.mxu0 0.0
        %352 = vmatprep.subr.mxu0 0.0
        %353 = vmatpush1.msra.mxu0 0.0
        %354 = vmatprep.subr.mxu0 0.0
        %355 = vmatpush1.msra.mxu0 0.0
        %356 = vmatprep.subr.mxu0 0.0
        %357 = vmatpush1.msra.mxu0 0.0
        %358 = vmatprep.subr.mxu0 0.0
        %359 = vmatpush1.msra.mxu0 0.0
        %360 = vmatprep.subr.mxu0 0.0
        %361 = vmatpush1.msra.mxu0 %v325
        %362 = vmatprep.subr.mxu0 0.0
        %363 = vmatpush1.msra.mxu0 %v324
        %364 = vmatprep.subr.mxu0 0.0
        %365 = vmatpush1.msra.mxu0 %v323
        %366 = vmatprep.subr.mxu0 0.0
        %367 = vmatpush1.msra.mxu0 %v322
        %368 = vmatprep.subr.mxu0 0.0
        %369 = vmatpush2.msra.mxu0 0.0
        %370 = vmatprep.subr.mxu0 0.0
        %371 = vmatpush2.msra.mxu0 0.0
        %372 = vmatprep.subr.mxu0 0.0
        %373 = vmatpush2.msra.mxu0 0.0
        %374 = vmatprep.subr.mxu0 0.0
        %375 = vmatpush2.msra.mxu0 0.0
        %376 = vmatprep.subr.mxu0 0.0
        %377 = vmatpush2.msra.mxu0 0.0
        %378 = vmatprep.subr.mxu0 0.0
        %379 = vmatpush2.msra.mxu0 0.0
        %380 = vmatprep.subr.mxu0 0.0
        %381 = vmatpush2.msra.mxu0 0.0
        %382 = vmatprep.subr.mxu0 0.0
        %383 = vmatpush2.msra.mxu0 0.0
        %384 = vmatprep.subr.mxu0 0.0
        %385 = vmatpush2.msra.mxu0 0.0
        %386 = vmatprep.subr.mxu0 0.0
        %387 = vmatpush2.msra.mxu0 0.0
        %388 = vmatprep.subr.mxu0 0.0
        %389 = vmatpush2.msra.mxu0 0.0
        %390 = vmatprep.subr.mxu0 0.0
        %391 = vmatpush2.msra.mxu0 0.0
        %392 = vmatprep.subr.mxu0 0.0
        %393 = vmatpush2.msra.mxu0 0.0
        %394 = vmatprep.subr.mxu0 0.0
        %395 = vmatpush2.msra.mxu0 0.0
        %396 = vmatprep.subr.mxu0 0.0
        %397 = vmatpush2.msra.mxu0 0.0
        %398 = vmatprep.subr.mxu0 0.0
        %399 = vmatpush2.msra.mxu0 0.0
        %400 = vmatprep.mubr.f32.mxu0 0.0
        %401 = vmatmul.mubr.f32.gmra.mxu0 %v334
        %v402 = vpop.f32.mrf.mxu0
        %v403 = vadd.f32 %v331, %v402
        %v404 = vpop.f32.mrf.mxu0
        %405 = vdwg.mxu0
        %vm406 = vcmask 785408
        %407 = vst.msk [vmem:[%s286] sm:$0xff] %vm406, %v403
        %s408 = sand.u32 %s165, 1
        %s409 = scalar_lea.sflag [#allocation4], %s408
        %s410 = sand.u32 %s165, 1
        %s411 = smul.addr %s410, 8
        %s412 = scalar_lea.vmem [#allocation7], %s411
        // Predicated region
        $region49: #{tpu_custom_call.1} parent=39 // pred_check
          %p413 = pneg %p175
        $region50: #{tpu_custom_call.1} parent=39 // pred_check_branch
          %415 = sbr.rel (%p413) target = $region52
        $region51: #{tpu_custom_call.1} parent=39 // pred_region
          %s417 = ssub.s32 128, 128
          %418 = vsyncadd %s409, %s417
          %s419 = sadd.s32 %s28, %s27
          %s420 = smul.addr %s419, 128
          %s421 = scalar_lea.hbm %s5, %s420
          %s423 = sshll.u32 %s412, 4
          %s424 = int_to_ptr.vmem [resolvable:$true] %s423
          %426 = dma.vmem_to_hbm [thread:$0]  %s424, 128, %s421, %s409
        $region52: #{tpu_custom_call.1} parent=39 // pred_fallthru
          _
      $region40: #{tpu_custom_call.1} parent=5 // pred_fallthru
        _
      %p427 = scmp.le.s32.totalorder 2, %s18
      // Predicated region
      $region53: #{tpu_custom_call.1} parent=5 // pred_check
        %p428 = pneg %p427
      $region54: #{tpu_custom_call.1} parent=5 // pred_check_branch
        %430 = sbr.rel (%p428) target = $region56
      $region55: #{tpu_custom_call.1} parent=5 // pred_region
        %s431 = ssub.s32 %s18, 2
        // Predicated region
        $region57: #{tpu_custom_call.1} parent=55 // pred_check
          %p432 = pneg %p181
        $region58: #{tpu_custom_call.1} parent=55 // pred_check_branch
          %434 = sbr.rel (%p432) target = $region60
        $region59: #{tpu_custom_call.1} parent=55 // pred_region
          %s435 = sand.u32 %s166, 1
          %s436 = scalar_lea.sflag [#allocation4], %s435
          %s437 = sand.u32 %s166, 1
          %s438 = smul.addr %s437, 8
          %s439 = scalar_lea.vmem [#allocation7], %s438
          %440 = dma.done %s436, 128
        $region60: #{tpu_custom_call.1} parent=55 // pred_fallthru
          _
      $region56: #{tpu_custom_call.1} parent=5 // pred_fallthru
        _
    $region6: #{tpu_custom_call.1} parent=1 // loop_footer
      %s22 = sadd.s32 1, %s18
    $region7: #{tpu_custom_call.1} parent=1 // loop_footer_branch
      %17 = sbr.rel target = $region3
    $region8: #{tpu_custom_call.1} parent=1 // loop_exit
      _
    %441 = vsyncpa [#allocation3], 1
    %s442 = scalar_lea.sflag [#allocation3], 1
    %443 = vsyncpa %s442, 1
    %444 = vsyncpa [#allocation6], 1
    %445 = vsyncpa [#allocation4], 1
    %s446 = scalar_lea.sflag [#allocation4], 1
    %447 = vsyncpa %s446, 1

</llo_original>
